<compile_context>
chip_gen: v6e
topology: v6e:2x2x1
jax: 0.10.0
libtpu: 0.0.40
codegen_flags: <defaults>
</compile_context>

<pallas_src>
import jax
import jax.numpy as jnp
from jax.experimental import pallas as pl
from jax.experimental.pallas import tpu as pltpu

HIDDEN = 32        # hidden_dim (demo size; multiple of 8)
TECH_IN = 4        # use_investment_as_feature=True -> 4 features
FLOW_IN = 2
EPS = 1e-8
ATOL = 1e-4        # torch.isclose(S, D, atol=1e-4); rtol stays at default 1e-5
RTOL = 1e-5
LANES = 128


def _round_up(x, m):
    return ((x + m - 1) // m) * m


# ----------------------------------------------------------------------------
# Kernel
# ----------------------------------------------------------------------------
def _mlp_model_kernel(scalars_ref, data_ref, slab_ref, out_ref):
    NP = out_ref.shape[1] // 2          # lane-padded entity count (static)
    H = HIDDEN

    # SMEM scalars: [total_demand, b3, fb2]
    D = scalars_ref[0]
    b3 = scalars_ref[1]
    fb2 = scalars_ref[2]

    # Packed input slab (8, NP) f32:
    #   rows 0:4 tech^T, rows 4:6 flow caps^T, row 6 ones (bias), row 7 zero.
    # Repair math stays f32; only the matmul operand copy is bf16.
    data = data_ref[...]                                     # (8, NP) f32
    x_bf = data.astype(jnp.bfloat16)                         # MXU operand

    # Packed bf16 parameter slab (3H+16, 128):
    #   rows 0:2H   = block-diag first layer  [w1|  .  | b1 ;  . | f1 | fb1]
    #   rows 2H:3H  = w2 (cols 0:H), b2 (col H)
    #   rows 3H:3H+2= heads: row0 = [w3 | 0], row1 = [0 | f2]
    w_in = slab_ref[0:2 * H, 0:8]                            # (2H, 8)  bf16
    w2 = slab_ref[2 * H:3 * H, 0:H]                          # (H, H)   bf16
    b2 = slab_ref[2 * H:3 * H, H:H + 1].astype(jnp.float32)  # (H, 1)   f32
    w_head = slab_ref[3 * H:3 * H + 2, 0:2 * H]              # (2, 2H)  bf16

    # ---- merged first layers (biases folded via ones row) --------------------
    pre = jnp.dot(w_in, x_bf, preferred_element_type=jnp.float32)   # (2H, NP) f32
    h1 = jnp.maximum(pre[0:H, :], 0.0)                               # tech hidden 1
    g = jnp.tanh(pre[H:2 * H, :])                                    # flow hidden

    # ---- tech hidden layer 2 -------------------------------------------------
    h2 = jnp.maximum(
        jnp.dot(w2, h1.astype(jnp.bfloat16),
                preferred_element_type=jnp.float32) + b2, 0.0)       # (H, NP)

    # ---- merged heads: (2, 2H) @ [h2; g] -> row0 raw_prod, row1 raw_flow ----
    hg = jnp.concatenate([h2.astype(jnp.bfloat16),
                          g.astype(jnp.bfloat16)], axis=0)           # (2H, NP) bf16
    raw = jnp.dot(w_head, hg, preferred_element_type=jnp.float32)    # (2, NP)  f32
    raw_prod = raw[0:1, :] + b3                                      # (1, NP)
    raw_flow = raw[1:2, :] + fb2                                     # (1, NP)

    # ---- ProportionalCompletionLayer (branch-free; padded cols contribute 0)
    p_max = data[1:2, :] * data[2:3, :] * data[3:4, :]               # (1, NP)
    p_bnd = p_max * jax.nn.sigmoid(raw_prod)                         # (1, NP)
    slack = p_max - p_bnd                                            # (1, NP)

    # One stacked cross-lane reduction: sums = [[S], [sum(slack)]]
    sums = jnp.sum(jnp.concatenate([p_bnd, slack], axis=0),
                   axis=-1, keepdims=True)                           # (2, 1)
    S = sums[0:1, :]                                                 # (1, 1)
    total_slack = sums[1:2, :] + EPS                                 # (1, 1)
    inv = pl.reciprocal(sums + EPS, approx=True)                     # (2, 1)
    inv_bnd = inv[0:1, :]                                            # 1/(S+eps)
    inv_slack = inv[1:2, :]                                          # 1/total_slack

    is_close = jnp.abs(S - D) <= (ATOL + RTOL * jnp.abs(D))          # (1, 1) bool
    shortfall = D - S                                                # (1, 1)
    under = jnp.where(total_slack < shortfall, p_max,
                      p_bnd + (shortfall * inv_slack) * slack)       # (1, NP)
    over = (1.0 - (S - D) * inv_bnd) * p_bnd                         # (1, NP)
    prod = jnp.where(is_close, p_bnd, jnp.where(S < D, under, over))

    # ---- FlowBoundLayer: single sigmoid, sigmoid(-x) = 1 - sigmoid(x) -------
    s = jax.nn.sigmoid(raw_flow)
    fl = jnp.where(raw_flow < 0.0,
                   (1.0 - s) * data[4:5, :],     # import capacity
                   s * data[5:6, :])             # export capacity

    # Fused, lane-dense output: cols [0,NP) = production, [NP,2NP) = flow.
    out_ref[0:1, 0:NP] = prod
    out_ref[0:1, NP:2 * NP] = fl


# ----------------------------------------------------------------------------
# Host-side packing + wrapper
# ----------------------------------------------------------------------------
def _pack_params(p, hidden=HIDDEN):
    """Pack all weights/biases into ONE bf16 (3H+16, 128) slab (single DMA)."""
    H = hidden
    slab = jnp.zeros((3 * H + 16, LANES), jnp.float32)
    # block-diagonal first layer; biases in col 6 (data row 6 == 1.0)
    slab = slab.at[0:H, 0:TECH_IN].set(p["w1"])
    slab = slab.at[0:H, 6:7].set(p["b1"])
    slab = slab.at[H:2 * H, TECH_IN:TECH_IN + FLOW_IN].set(p["f1"])
    slab = slab.at[H:2 * H, 6:7].set(p["fb1"])
    # second tech layer
    slab = slab.at[2 * H:3 * H, 0:H].set(p["w2"])
    slab = slab.at[2 * H:3 * H, H:H + 1].set(p["b2"])
    # merged heads: row 0 = [w3 | 0], row 1 = [0 | f2]
    slab = slab.at[3 * H:3 * H + 1, 0:H].set(p["w3"])
    slab = slab.at[3 * H + 1:3 * H + 2, H:2 * H].set(p["f2"])
    return slab.astype(jnp.bfloat16)


def _pack_data(tech, flow, NP):
    """Single pad+concat: (8, NP) lane-dense, transposed input slab."""
    n_tech, n_flow = tech.shape[0], flow.shape[0]
    tech_t = jnp.pad(tech.T.astype(jnp.float32), ((0, 0), (0, NP - n_tech)))
    flow_t = jnp.pad(flow.T.astype(jnp.float32), ((0, 0), (0, NP - n_flow)))
    ones = jnp.ones((1, NP), jnp.float32)       # bias lane (b1/fb1 folded)
    zero = jnp.zeros((1, NP), jnp.float32)
    return jnp.concatenate([tech_t, flow_t, ones, zero], axis=0)


def make_mlp_model(params, hidden=HIDDEN):
    """Pack the parameter slab ONCE and return a jitted forward closure."""
    assert hidden == HIDDEN
    slab = _pack_params(params, hidden)                     # cached across calls
    scal_biases = jnp.stack([params["b3"].reshape(()),
                             params["fb2"].reshape(())]).astype(jnp.float32)

    @jax.jit
    def forward(tech_input, flow_input, demand_input):
        n_tech = tech_input.shape[0]
        n_flow = flow_input.shape[0]
        NP = _round_up(max(n_tech, n_flow, 1), LANES)

        data = _pack_data(tech_input, flow_input, NP)
        # demand sum + scalar biases go to SMEM (no VMEM DMA / in-kernel reduce)
        scalars = jnp.concatenate(
            [jnp.sum(demand_input[:, 0]).astype(jnp.float32).reshape(1),
             scal_biases])

        out = pl.pallas_call(
            _mlp_model_kernel,
            out_shape=jax.ShapeDtypeStruct((1, 2 * NP), jnp.float32),
            in_specs=[pl.BlockSpec(memory_space=pltpu.MemorySpace.SMEM),
                      pl.BlockSpec(memory_space=pltpu.MemorySpace.VMEM),
                      pl.BlockSpec(memory_space=pltpu.MemorySpace.VMEM)],
            out_specs=pl.BlockSpec(memory_space=pltpu.MemorySpace.VMEM),
        )(scalars, data, slab)

        prod = out[0, 0:n_tech].reshape(n_tech, 1)
        fl = out[0, NP:NP + n_flow].reshape(n_flow, 1)
        return prod, fl

    return forward


_FWD_CACHE = {}


def mlp_model_forward(tech_input, flow_input, demand_input, params):
    """Convenience wrapper with a cached, pre-packed forward per params dict."""
    fwd = _FWD_CACHE.get(id(params))
    if fwd is None:
        fwd = make_mlp_model(params)
        _FWD_CACHE[id(params)] = fwd
    return fwd(tech_input, flow_input, demand_input)


# ----------------------------------------------------------------------------
# Params + pure-JAX reference (PyTorch semantics)
# ----------------------------------------------------------------------------
def init_params(key, hidden=HIDDEN):
    """Deterministic init; weights stored torch-style as (out, in)."""
    ks = jax.random.split(key, 10)

    def lin(kw, kb, fan_in, fan_out):
        bound = 1.0 / float(fan_in) ** 0.5
        w = jax.random.uniform(kw, (fan_out, fan_in), jnp.float32, -bound, bound)
        b = jax.random.uniform(kb, (fan_out, 1), jnp.float32, -bound, bound)
        return w, b

    w1, b1 = lin(ks[0], ks[1], TECH_IN, hidden)
    w2, b2 = lin(ks[2], ks[3], hidden, hidden)
    w3, b3 = lin(ks[4], ks[5], hidden, 1)
    f1, fb1 = lin(ks[6], ks[7], FLOW_IN, hidden)
    f2, fb2 = lin(ks[8], ks[9], hidden, 1)
    return dict(w1=w1, b1=b1, w2=w2, b2=b2, w3=w3, b3=b3.reshape(()),
                f1=f1, fb1=fb1, f2=f2, fb2=fb2.reshape(()))


def reference_forward(tech, flow, demand, p):
    """Pure-JAX f32 reference matching the PyTorch module."""
    h = jnp.maximum(tech @ p["w1"].T + p["b1"].T, 0.0)
    h = jnp.maximum(h @ p["w2"].T + p["b2"].T, 0.0)
    raw_prod = h @ p["w3"].T + p["b3"]                       # (N_tech, 1)
    g = jnp.tanh(flow @ p["f1"].T + p["fb1"].T)
    raw_flow = g @ p["f2"].T + p["fb2"]                      # (N_flow, 1)

    p_max = tech[:, 1:2] * tech[:, 2:3] * tech[:, 3:4]
    D = jnp.sum(demand[:, 0])
    p_bnd = p_max * jax.nn.sigmoid(raw_prod)
    S = jnp.sum(p_bnd)
    is_close = jnp.abs(S - D) <= (ATOL + RTOL * jnp.abs(D))
    slack = p_max - p_bnd
    total_slack = jnp.sum(slack) + EPS
    under = jnp.where(total_slack < (D - S), p_max,
                      p_bnd + ((D - S) / total_slack) * slack)
    total_bnd = S + EPS
    over = jnp.where(total_bnd < EPS, jnp.zeros_like(p_bnd),
                     (1.0 - (S - D) / total_bnd) * p_bnd)
    prod = jnp.where(is_close, p_bnd, jnp.where(S < D, under, over))

    imp, exp = flow[:, 0:1], flow[:, 1:2]
    fl = jnp.where(raw_flow < 0, jax.nn.sigmoid(-raw_flow) * imp,
                   jax.nn.sigmoid(raw_flow) * exp)
    return prod, fl


if __name__ == "__main__":
    key = jax.random.PRNGKey(0)
    k_param, k_tech, k_flow, k_demand = jax.random.split(key, 4)

    params = init_params(k_param)

    n_tech, n_flow, n_demand = 8, 8, 8
    # tech features: (something, capacity, availability, investment) -> positive
    tech_input = jax.random.uniform(k_tech, (n_tech, TECH_IN), jnp.float32, 0.1, 2.0)
    # flow features: (import_capacity, export_capacity)
    flow_input = jax.random.uniform(k_flow, (n_flow, FLOW_IN), jnp.float32, 0.1, 3.0)
    demand_input = jax.random.uniform(k_demand, (n_demand, 1), jnp.float32, 0.1, 1.5)

    forward = make_mlp_model(params)            # packs the parameter slab ONCE
    prod, flow = forward(tech_input, flow_input, demand_input)
    jax.block_until_ready((prod, flow))

    ref_prod, ref_flow = reference_forward(tech_input, flow_input, demand_input, params)
    assert prod.shape == (n_tech, 1) and flow.shape == (n_flow, 1)
    # bf16 MXU operands + approx reciprocals vs. the f32 reference -> 5e-3 band.
    assert jnp.allclose(prod, ref_prod, rtol=5e-3, atol=5e-3)
    assert jnp.allclose(flow, ref_flow, rtol=5e-3, atol=5e-3)

    print("KERNEL_OK")
</pallas_src>

<mosaic_0001>
module attributes {stable_mosaic.version = 11 : i64} {
  func.func @_mlp_model_kernel(%arg0: memref<3xf32, #tpu.memory_space<smem>>, %arg1: memref<8x128xf32, #tpu.memory_space<vmem>>, %arg2: memref<112x128xbf16, #tpu.memory_space<vmem>>, %arg3: memref<1x256xf32, #tpu.memory_space<vmem>>) attributes {dimension_semantics = [], scalar_prefetch = 0 : i64, scratch_operands = 0 : i64, tpu.core_type = #tpu.core_type<tc>} {
    %c0 = arith.constant 0 : index
    %0 = memref.load %arg0[%c0] : memref<3xf32, #tpu.memory_space<smem>>
    %c1 = arith.constant 1 : index
    %1 = memref.load %arg0[%c1] : memref<3xf32, #tpu.memory_space<smem>>
    %c2 = arith.constant 2 : index
    %2 = memref.load %arg0[%c2] : memref<3xf32, #tpu.memory_space<smem>>
    %c0_0 = arith.constant 0 : index
    %c0_1 = arith.constant 0 : index
    %3 = vector.load %arg1[%c0_0, %c0_1] : memref<8x128xf32, #tpu.memory_space<vmem>>, vector<8x128xf32>
    %4 = arith.truncf %3 : vector<8x128xf32> to vector<8x128xbf16>
    %c0_2 = arith.constant 0 : index
    %c0_3 = arith.constant 0 : index
    %5 = vector.load %arg2[%c0_2, %c0_3] : memref<112x128xbf16, #tpu.memory_space<vmem>>, vector<64x8xbf16>
    %c64 = arith.constant 64 : index
    %c0_4 = arith.constant 0 : index
    %6 = vector.load %arg2[%c64, %c0_4] : memref<112x128xbf16, #tpu.memory_space<vmem>>, vector<32x32xbf16>
    %c64_5 = arith.constant 64 : index
    %c32 = arith.constant 32 : index
    %7 = vector.load %arg2[%c64_5, %c32] : memref<112x128xbf16, #tpu.memory_space<vmem>>, vector<32x1xbf16>
    %8 = arith.extf %7 : vector<32x1xbf16> to vector<32x1xf32>
    %c96 = arith.constant 96 : index
    %c0_6 = arith.constant 0 : index
    %9 = vector.load %arg2[%c96, %c0_6] : memref<112x128xbf16, #tpu.memory_space<vmem>>, vector<2x64xbf16>
    %cst = arith.constant dense<0.000000e+00> : vector<64x128xf32>
    %10 = tpu.matmul %5, %4, %cst {dimension_numbers = #tpu.dot_dimension_numbers<[1], [0], [0], [1], [0, 0, 1, 1], [], []>} : vector<64x8xbf16>, vector<8x128xbf16>, vector<64x128xf32> -> vector<64x128xf32>
    %11 = vector.extract_strided_slice %10 {offsets = [0, 0], sizes = [32, 128], strides = [1, 1]} : vector<64x128xf32> to vector<32x128xf32>
    %cst_7 = arith.constant 0.000000e+00 : f32
    %12 = vector.broadcast %cst_7 : f32 to vector<32x128xf32>
    %13 = arith.maximumf %11, %12 : vector<32x128xf32>
    %14 = vector.extract_strided_slice %10 {offsets = [32, 0], sizes = [32, 128], strides = [1, 1]} : vector<64x128xf32> to vector<32x128xf32>
    %15 = math.tanh %14 : vector<32x128xf32>
    %16 = arith.truncf %13 : vector<32x128xf32> to vector<32x128xbf16>
    %cst_8 = arith.constant dense<0.000000e+00> : vector<32x128xf32>
    %17 = tpu.matmul %6, %16, %cst_8 {dimension_numbers = #tpu.dot_dimension_numbers<[1], [0], [0], [1], [0, 0, 1, 1], [], []>} : vector<32x32xbf16>, vector<32x128xbf16>, vector<32x128xf32> -> vector<32x128xf32>
    %18 = vector.broadcast %8 : vector<32x1xf32> to vector<32x128xf32>
    %19 = arith.addf %17, %18 : vector<32x128xf32>
    %cst_9 = arith.constant 0.000000e+00 : f32
    %20 = vector.broadcast %cst_9 : f32 to vector<32x128xf32>
    %21 = arith.maximumf %19, %20 : vector<32x128xf32>
    %22 = arith.truncf %21 : vector<32x128xf32> to vector<32x128xbf16>
    %23 = arith.truncf %15 : vector<32x128xf32> to vector<32x128xbf16>
    %24 = tpu.concatenate %22, %23 in 0 : vector<32x128xbf16>, vector<32x128xbf16> -> vector<64x128xbf16>
    %cst_10 = arith.constant dense<0.000000e+00> : vector<2x128xf32>
    %25 = tpu.matmul %9, %24, %cst_10 {dimension_numbers = #tpu.dot_dimension_numbers<[1], [0], [0], [1], [0, 0, 1, 1], [], []>} : vector<2x64xbf16>, vector<64x128xbf16>, vector<2x128xf32> -> vector<2x128xf32>
    %26 = vector.extract_strided_slice %25 {offsets = [0, 0], sizes = [1, 128], strides = [1, 1]} : vector<2x128xf32> to vector<1x128xf32>
    %27 = vector.broadcast %1 : f32 to vector<1x128xf32>
    %28 = arith.addf %26, %27 : vector<1x128xf32>
    %29 = vector.extract_strided_slice %25 {offsets = [1, 0], sizes = [1, 128], strides = [1, 1]} : vector<2x128xf32> to vector<1x128xf32>
    %30 = vector.broadcast %2 : f32 to vector<1x128xf32>
    %31 = arith.addf %29, %30 : vector<1x128xf32>
    %32 = vector.extract_strided_slice %3 {offsets = [1, 0], sizes = [1, 128], strides = [1, 1]} : vector<8x128xf32> to vector<1x128xf32>
    %33 = vector.extract_strided_slice %3 {offsets = [2, 0], sizes = [1, 128], strides = [1, 1]} : vector<8x128xf32> to vector<1x128xf32>
    %34 = arith.mulf %32, %33 : vector<1x128xf32>
    %35 = vector.extract_strided_slice %3 {offsets = [3, 0], sizes = [1, 128], strides = [1, 1]} : vector<8x128xf32> to vector<1x128xf32>
    %36 = arith.mulf %34, %35 : vector<1x128xf32>
    %37 = arith.negf %28 : vector<1x128xf32>
    %38 = math.exp %37 : vector<1x128xf32>
    %cst_11 = arith.constant 1.000000e+00 : f32
    %39 = vector.broadcast %cst_11 : f32 to vector<1x128xf32>
    %40 = arith.addf %39, %38 : vector<1x128xf32>
    %41 = arith.divf %39, %40 : vector<1x128xf32>
    %42 = arith.mulf %36, %41 : vector<1x128xf32>
    %43 = arith.subf %36, %42 : vector<1x128xf32>
    %44 = tpu.concatenate %42, %43 in 0 : vector<1x128xf32>, vector<1x128xf32> -> vector<2x128xf32>
    %cst_12 = arith.constant dense<0.000000e+00> : vector<2xf32>
    %45 = vector.multi_reduction <add>, %44, %cst_12 [1] : vector<2x128xf32> to vector<2xf32>
    %46 = vector.shape_cast %45 : vector<2xf32> to vector<2x1xf32>
    %47 = vector.extract_strided_slice %46 {offsets = [0, 0], sizes = [1, 1], strides = [1, 1]} : vector<2x1xf32> to vector<1x1xf32>
    %48 = vector.extract_strided_slice %46 {offsets = [1, 0], sizes = [1, 1], strides = [1, 1]} : vector<2x1xf32> to vector<1x1xf32>
    %cst_13 = arith.constant 9.99999993E-9 : f32
    %49 = vector.broadcast %cst_13 : f32 to vector<1x1xf32>
    %50 = arith.addf %48, %49 : vector<1x1xf32>
    %cst_14 = arith.constant 9.99999993E-9 : f32
    %51 = vector.broadcast %cst_14 : f32 to vector<2x1xf32>
    %52 = arith.addf %46, %51 : vector<2x1xf32>
    %53 = tpu.reciprocal %52 {approx = true} : vector<2x1xf32> -> vector<2x1xf32>
    %54 = vector.extract_strided_slice %53 {offsets = [0, 0], sizes = [1, 1], strides = [1, 1]} : vector<2x1xf32> to vector<1x1xf32>
    %55 = vector.extract_strided_slice %53 {offsets = [1, 0], sizes = [1, 1], strides = [1, 1]} : vector<2x1xf32> to vector<1x1xf32>
    %56 = vector.broadcast %0 : f32 to vector<1x1xf32>
    %57 = arith.subf %47, %56 : vector<1x1xf32>
    %58 = math.absf %57 : vector<1x1xf32>
    %59 = math.absf %0 : f32
    %cst_15 = arith.constant 9.99999974E-6 : f32
    %60 = arith.mulf %cst_15, %59 : f32
    %cst_16 = arith.constant 9.99999974E-5 : f32
    %61 = arith.addf %cst_16, %60 : f32
    %62 = vector.broadcast %61 : f32 to vector<1x1xf32>
    %63 = arith.cmpf ole, %58, %62 : vector<1x1xf32>
    %64 = vector.broadcast %0 : f32 to vector<1x1xf32>
    %65 = arith.subf %64, %47 : vector<1x1xf32>
    %66 = arith.cmpf olt, %50, %65 : vector<1x1xf32>
    %67 = arith.mulf %65, %55 : vector<1x1xf32>
    %68 = vector.broadcast %67 : vector<1x1xf32> to vector<1x128xf32>
    %69 = arith.mulf %68, %43 : vector<1x128xf32>
    %70 = arith.addf %42, %69 : vector<1x128xf32>
    %71 = vector.shape_cast %66 : vector<1x1xi1> to vector<1x1xi1>
    %72 = vector.broadcast %71 : vector<1x1xi1> to vector<1x128xi1>
    %73 = arith.select %72, %36, %70 : vector<1x128xi1>, vector<1x128xf32>
    %74 = vector.broadcast %0 : f32 to vector<1x1xf32>
    %75 = arith.subf %47, %74 : vector<1x1xf32>
    %76 = arith.mulf %75, %54 : vector<1x1xf32>
    %cst_17 = arith.constant 1.000000e+00 : f32
    %77 = vector.broadcast %cst_17 : f32 to vector<1x1xf32>
    %78 = arith.subf %77, %76 : vector<1x1xf32>
    %79 = vector.broadcast %78 : vector<1x1xf32> to vector<1x128xf32>
    %80 = arith.mulf %79, %42 : vector<1x128xf32>
    %81 = vector.broadcast %0 : f32 to vector<1x1xf32>
    %82 = arith.cmpf olt, %47, %81 : vector<1x1xf32>
    %83 = vector.shape_cast %82 : vector<1x1xi1> to vector<1x1xi1>
    %84 = vector.broadcast %83 : vector<1x1xi1> to vector<1x128xi1>
    %85 = arith.select %84, %73, %80 : vector<1x128xi1>, vector<1x128xf32>
    %86 = vector.shape_cast %63 : vector<1x1xi1> to vector<1x1xi1>
    %87 = vector.broadcast %86 : vector<1x1xi1> to vector<1x128xi1>
    %88 = arith.select %87, %42, %85 : vector<1x128xi1>, vector<1x128xf32>
    %89 = arith.negf %31 : vector<1x128xf32>
    %90 = math.exp %89 : vector<1x128xf32>
    %cst_18 = arith.constant 1.000000e+00 : f32
    %91 = vector.broadcast %cst_18 : f32 to vector<1x128xf32>
    %92 = arith.addf %91, %90 : vector<1x128xf32>
    %93 = arith.divf %91, %92 : vector<1x128xf32>
    %cst_19 = arith.constant 0.000000e+00 : f32
    %94 = vector.broadcast %cst_19 : f32 to vector<1x128xf32>
    %95 = arith.cmpf olt, %31, %94 : vector<1x128xf32>
    %cst_20 = arith.constant 1.000000e+00 : f32
    %96 = vector.broadcast %cst_20 : f32 to vector<1x128xf32>
    %97 = arith.subf %96, %93 : vector<1x128xf32>
    %98 = vector.extract_strided_slice %3 {offsets = [4, 0], sizes = [1, 128], strides = [1, 1]} : vector<8x128xf32> to vector<1x128xf32>
    %99 = arith.mulf %97, %98 : vector<1x128xf32>
    %100 = vector.extract_strided_slice %3 {offsets = [5, 0], sizes = [1, 128], strides = [1, 1]} : vector<8x128xf32> to vector<1x128xf32>
    %101 = arith.mulf %93, %100 : vector<1x128xf32>
    %102 = arith.select %95, %99, %101 : vector<1x128xi1>, vector<1x128xf32>
    %c0_21 = arith.constant 0 : index
    %c0_22 = arith.constant 0 : index
    %103 = vector.load %arg3[%c0_21, %c0_22] : memref<1x256xf32, #tpu.memory_space<vmem>>, vector<1x128xf32>
    tpu.vector_store %arg3[%c0_21, %c0_22], %88 {strides = array<i32>} : memref<1x256xf32, #tpu.memory_space<vmem>>, vector<1x128xf32>,
    %c0_23 = arith.constant 0 : index
    %c128 = arith.constant 128 : index
    %104 = vector.load %arg3[%c0_23, %c128] : memref<1x256xf32, #tpu.memory_space<vmem>>, vector<1x128xf32>
    tpu.vector_store %arg3[%c0_23, %c128], %102 {strides = array<i32>} : memref<1x256xf32, #tpu.memory_space<vmem>>, vector<1x128xf32>,
    return
  }
}

</mosaic_0001>

<llo_original>
// kernel: forward.1
$region0: #{forward.1}
  #allocation0 [shape = 'u32[]', space=smem, size = 0x4, offset = 0x4, fixed_abs, tag = 'smem constant byte address 0x4 - core index']
  #allocation1 [shape = 'u32[144,128]{1,0:T(1,128)}', space=vmem, size = 0x12000, scoped, tag = 'internal scratch']
  %s0 = inlined_call_operand.vmem [shape: f32[3], index: 0, kind: input, shape index: {}]
  %s1 = inlined_call_operand.vmem [shape: f32[8,128], index: 1, kind: input, shape index: {}]
  %s2 = inlined_call_operand.hbm [shape: bf16[112,128], index: 2, kind: input, shape index: {}]
  %s3 = inlined_call_operand.vmem [shape: f32[1,256], index: 3, kind: output, shape index: {}]
  %s4 = sld [smem:[#allocation0]]
  $region30: #{forward.1} parent=0
    _
  %s6 = ssub.s32 1, %s4
  %s7 = scalar_select 0, %s6, %s4
  $region1: #{forward.1} parent=0
    #allocation2 [shape = 'u8[512]{0}', space=smem, size = 0x200, scoped, tag = 'input window, operand 0, single buffered']
    #allocation3 [shape = 's32[1]{0}', space=sflag, size = 0x4, scoped, tag = 'scoped memory for forward.1']
    #allocation4 [shape = 's32[1]{0}', space=sflag, size = 0x4, scoped, tag = 'scoped memory for forward.1']
    #allocation5 [shape = 'u8[28672]{0}', space=vmem, size = 0x7000, scoped, tag = 'input window, operand 2, single buffered']
    %8 = vsyncpa [#allocation4], 0
    %9 = vsyncpa [#allocation3], 0
    // Predicated region
    $region2: #{forward.1} parent=1 // pred_check
      _
    $region3: #{forward.1} parent=1 // pred_check_branch
      %11 = sbr.rel (0) target = $region5
    $region4: #{forward.1} parent=1 // pred_region
      %s13 = ssub.s32 16, 16
      %14 = vsyncadd [#allocation4], %s13
      %s16 = sshll.u32 %s0, 4
      %s17 = int_to_ptr.vmem [resolvable:$true] %s16
      %19 = dma.vmem_to_smem %s17, 16, [#allocation2], [#allocation4]
    $region5: #{forward.1} parent=1 // pred_fallthru
      _
    // Predicated region
    $region6: #{forward.1} parent=1 // pred_check
      _
    $region7: #{forward.1} parent=1 // pred_check_branch
      %21 = sbr.rel (0) target = $region9
    $region8: #{forward.1} parent=1 // pred_region
      _
    $region9: #{forward.1} parent=1 // pred_fallthru
      _
    // Predicated region
    $region10: #{forward.1} parent=1 // pred_check
      _
    $region11: #{forward.1} parent=1 // pred_check_branch
      %23 = sbr.rel (0) target = $region13
    $region12: #{forward.1} parent=1 // pred_region
      %s25 = ssub.s32 896, 896
      %26 = vsyncadd [#allocation3], %s25
      %s27 = sshll.u32 [#allocation5], 4
      %s28 = int_to_ptr.vmem [resolvable:$true] %s27
      %33 = dma.hbm_to_vmem [thread:$0]  %s2, 896, %s28, [#allocation3], 64, 64, 4
    $region13: #{forward.1} parent=1 // pred_fallthru
      _
    // Predicated region
    $region14: #{forward.1} parent=1 // pred_check
      _
    $region15: #{forward.1} parent=1 // pred_check_branch
      %35 = sbr.rel (0) target = $region17
    $region16: #{forward.1} parent=1 // pred_region
      %36 = dma.done [#allocation4], 16
    $region17: #{forward.1} parent=1 // pred_fallthru
      _
    // Predicated region
    $region18: #{forward.1} parent=1 // pred_check
      _
    $region19: #{forward.1} parent=1 // pred_check_branch
      %38 = sbr.rel (0) target = $region21
    $region20: #{forward.1} parent=1 // pred_region
      %39 = dma.done [#allocation3], 896
    $region21: #{forward.1} parent=1 // pred_fallthru
      _
    %40 = sfence
    %s42 = sld [smem:[#allocation2]]
    %s43 = sld [smem:[#allocation2 + $0x1]]
    %s44 = sld [smem:[#allocation2 + $0x2]]
    %v45 = vld [vmem:[%s1] sm:$0xff]
    %v46 = vpack.c.bf16 %v45, %v45
    %v47 = vld [vmem:[#allocation5] sm:$0xf]
    %v48 = vld [vmem:[#allocation5 + $0x4] sm:$0xf]
    %v49 = vld [vmem:[#allocation5 + $0x8] sm:$0xf]
    %v50 = vld [vmem:[#allocation5 + $0xc] sm:$0xf]
    %v51 = vld [vmem:[#allocation5 + $0x10] sm:$0xf]
    %v52 = vld [vmem:[#allocation5 + $0x14] sm:$0xf]
    %v53 = vld [vmem:[#allocation5 + $0x18] sm:$0xf]
    %v54 = vld [vmem:[#allocation5 + $0x1c] sm:$0xf]
    %v55 = vld [vmem:[#allocation5 + $0x20] sm:$0xf]
    %v56 = vld [vmem:[#allocation5 + $0x24] sm:$0xf]
    %v57 = vld [vmem:[#allocation5 + $0x28] sm:$0xf]
    %v58 = vld [vmem:[#allocation5 + $0x2c] sm:$0xf]
    %v59 = vunpack.c.l.bf16 %v55
    %v60 = vunpack.c.l.bf16 %v56
    %v61 = vunpack.c.l.bf16 %v57
    %v62 = vunpack.c.l.bf16 %v58
    %v63 = vld [vmem:[#allocation5 + $0x30] sm:$0x1]
    %v72 = vunpack.c.l.b16 %v47
    %v73 = vunpack.c.l.b16 %v48
    %v74 = vunpack.c.l.b16 %v49
    %v75 = vunpack.c.l.b16 %v50
    %v76 = vunpack.c.l.b16 %v51
    %v77 = vunpack.c.l.b16 %v52
    %v78 = vunpack.c.l.b16 %v53
    %v79 = vunpack.c.l.b16 %v54
    %v80 = vpack.c.b16 %v73, %v72
    %v81 = vpack.c.b16 %v75, %v74
    %v82 = vpack.c.b16 %v77, %v76
    %v83 = vpack.c.b16 %v79, %v78
    %vm84 = vcmask 64512
    %v86 = vsel %vm84, %v80, 0
    %v89 = vsel %vm84, %v81, 0
    %v92 = vsel %vm84, %v82, 0
    %v95 = vsel %vm84, %v83, 0
    %vm97 = vcmask 1043456
    %v99 = vsel %vm97, %v46, 0
    %101 = vmatprep.subr.bf16.mxu0 0
    %102 = vmatpush1.bf16.msra.mxu0 0
    %103 = vmatprep.subr.bf16.mxu0 0
    %104 = vmatpush1.bf16.msra.mxu0 0
    %105 = vmatprep.subr.bf16.mxu0 0
    %106 = vmatpush1.bf16.msra.mxu0 0
    %107 = vmatprep.subr.bf16.mxu0 0
    %108 = vmatpush1.bf16.msra.mxu0 0
    %109 = vmatprep.subr.bf16.mxu0 0
    %110 = vmatpush1.bf16.msra.mxu0 0
    %111 = vmatprep.subr.bf16.mxu0 0
    %112 = vmatpush1.bf16.msra.mxu0 0
    %113 = vmatprep.subr.bf16.mxu0 0
    %114 = vmatpush1.bf16.msra.mxu0 0
    %115 = vmatprep.subr.bf16.mxu0 0
    %116 = vmatpush1.bf16.msra.mxu0 %v99
    %117 = vmatprep.subr.bf16.mxu0 0
    %118 = vmatpush2.bf16.msra.mxu0 0
    %119 = vmatprep.subr.bf16.mxu0 0
    %120 = vmatpush2.bf16.msra.mxu0 0
    %121 = vmatprep.subr.bf16.mxu0 0
    %122 = vmatpush2.bf16.msra.mxu0 0
    %123 = vmatprep.subr.bf16.mxu0 0
    %124 = vmatpush2.bf16.msra.mxu0 0
    %125 = vmatprep.subr.bf16.mxu0 0
    %126 = vmatpush2.bf16.msra.mxu0 0
    %127 = vmatprep.subr.bf16.mxu0 0
    %128 = vmatpush2.bf16.msra.mxu0 0
    %129 = vmatprep.subr.bf16.mxu0 0
    %130 = vmatpush2.bf16.msra.mxu0 0
    %131 = vmatprep.subr.bf16.mxu0 0
    %132 = vmatpush2.bf16.msra.mxu0 0
    %133 = vmatprep.mubr.bf16.mxu0 0
    %134 = vmatmul.mubr.bf16.gmra.mxu0 %v86
    %v135 = vpop.f32.mrf.mxu0
    %v136 = vadd.f32 0.0, %v135
    %v137 = vpop.f32.mrf.mxu0
    %v138 = vpop.f32.mrf.mxu0
    %v139 = vadd.f32 0.0, %v138
    %v140 = vpop.f32.mrf.mxu0
    %141 = vmatprep.mubr.bf16.mxu0 0
    %142 = vmatmul.mubr.bf16.gmra.mxu0 %v89
    %v143 = vpop.f32.mrf.mxu0
    %v144 = vadd.f32 0.0, %v143
    %v145 = vpop.f32.mrf.mxu0
    %v146 = vpop.f32.mrf.mxu0
    %v147 = vadd.f32 0.0, %v146
    %v148 = vpop.f32.mrf.mxu0
    %149 = vmatprep.mubr.bf16.mxu0 0
    %150 = vmatmul.mubr.bf16.gmra.mxu0 %v92
    %v151 = vpop.f32.mrf.mxu0
    %v152 = vadd.f32 0.0, %v151
    %v153 = vpop.f32.mrf.mxu0
    %v154 = vpop.f32.mrf.mxu0
    %v155 = vadd.f32 0.0, %v154
    %v156 = vpop.f32.mrf.mxu0
    %157 = vmatprep.mubr.bf16.mxu0 0
    %158 = vmatmul.mubr.bf16.gmra.mxu0 %v95
    %v159 = vpop.f32.mrf.mxu0
    %v160 = vadd.f32 0.0, %v159
    %v161 = vpop.f32.mrf.mxu0
    %v162 = vpop.f32.mrf.mxu0
    %v163 = vadd.f32 0.0, %v162
    %v164 = vpop.f32.mrf.mxu0
    %165 = vdwg.mxu0
    %v166 = vmax.f32 %v136, 0.0
    %v167 = vmax.f32 %v139, 0.0
    %v168 = vmax.f32 %v144, 0.0
    %v169 = vmax.f32 %v147, 0.0
    %v170 = vtanh.pop %v152
    %v171 = vtanh.pop %v155
    %v172 = vtanh.pop %v160
    %v173 = vtanh.pop %v163
    %v174 = vpack.c.bf16 %v167, %v166
    %v175 = vpack.c.bf16 %v169, %v168
    %177 = vset.pattern.permute.xlu0 32
    %178 = vperm.xlu0 %177, %v59
    %v179 = vpop.permute.xlu0 %178
    %182 = vset.pattern.permute.xlu0 32
    %183 = vperm.xlu0 %182, %v60
    %v184 = vpop.permute.xlu0 %183
    %187 = vset.pattern.permute.xlu0 32
    %188 = vperm.xlu0 %187, %v61
    %v189 = vpop.permute.xlu0 %188
    %192 = vset.pattern.permute.xlu0 32
    %193 = vperm.xlu0 %192, %v62
    %v194 = vpop.permute.xlu0 %193
    %v200 = vunpack.c.l.b16 %v55
    %v201 = vunpack.c.l.b16 %v56
    %v202 = vunpack.c.l.b16 %v57
    %v203 = vunpack.c.l.b16 %v58
    %v204 = vpack.c.b16 %v201, %v200
    %v205 = vpack.c.b16 %v203, %v202
    %vm206 = vcmask 261120
    %v208 = vsel %vm206, %v204, 0
    %v211 = vsel %vm206, %v205, 0
    %213 = vmatprep.subr.bf16.mxu0 0
    %214 = vmatpush1.bf16.msra.mxu0 0
    %215 = vmatprep.subr.bf16.mxu0 0
    %216 = vmatpush1.bf16.msra.mxu0 0
    %217 = vmatprep.subr.bf16.mxu0 0
    %218 = vmatpush1.bf16.msra.mxu0 0
    %219 = vmatprep.subr.bf16.mxu0 0
    %220 = vmatpush1.bf16.msra.mxu0 0
    %221 = vmatprep.subr.bf16.mxu0 0
    %222 = vmatpush1.bf16.msra.mxu0 0
    %223 = vmatprep.subr.bf16.mxu0 0
    %224 = vmatpush1.bf16.msra.mxu0 0
    %225 = vmatprep.subr.bf16.mxu0 0
    %226 = vmatpush1.bf16.msra.mxu0 %v175
    %227 = vmatprep.subr.bf16.mxu0 0
    %228 = vmatpush1.bf16.msra.mxu0 %v174
    %229 = vmatprep.subr.bf16.mxu0 0
    %230 = vmatpush2.bf16.msra.mxu0 0
    %231 = vmatprep.subr.bf16.mxu0 0
    %232 = vmatpush2.bf16.msra.mxu0 0
    %233 = vmatprep.subr.bf16.mxu0 0
    %234 = vmatpush2.bf16.msra.mxu0 0
    %235 = vmatprep.subr.bf16.mxu0 0
    %236 = vmatpush2.bf16.msra.mxu0 0
    %237 = vmatprep.subr.bf16.mxu0 0
    %238 = vmatpush2.bf16.msra.mxu0 0
    %239 = vmatprep.subr.bf16.mxu0 0
    %240 = vmatpush2.bf16.msra.mxu0 0
    %241 = vmatprep.subr.bf16.mxu0 0
    %242 = vmatpush2.bf16.msra.mxu0 0
    %243 = vmatprep.subr.bf16.mxu0 0
    %244 = vmatpush2.bf16.msra.mxu0 0
    %245 = vmatprep.mubr.bf16.mxu0 0
    %246 = vmatmul.mubr.bf16.gmra.mxu0 %v208
    %v247 = vpop.f32.mrf.mxu0
    %v248 = vadd.f32 %v179, %v247
    %v249 = vpop.f32.mrf.mxu0
    %v250 = vpop.f32.mrf.mxu0
    %v251 = vadd.f32 %v184, %v250
    %v252 = vpop.f32.mrf.mxu0
    %253 = vmatprep.mubr.bf16.mxu0 0
    %254 = vmatmul.mubr.bf16.gmra.mxu0 %v211
    %v255 = vpop.f32.mrf.mxu0
    %v256 = vadd.f32 %v189, %v255
    %v257 = vpop.f32.mrf.mxu0
    %v258 = vpop.f32.mrf.mxu0
    %v259 = vadd.f32 %v194, %v258
    %v260 = vpop.f32.mrf.mxu0
    %261 = vdwg.mxu0
    %v262 = vmax.f32 %v248, 0.0
    %v263 = vmax.f32 %v251, 0.0
    %v264 = vmax.f32 %v256, 0.0
    %v265 = vmax.f32 %v259, 0.0
    %v266 = vpack.c.bf16 %v263, %v262
    %v267 = vpack.c.bf16 %v265, %v264
    %v268 = vpack.c.bf16 %v171, %v170
    %v269 = vpack.c.bf16 %v173, %v172
    %vm270 = vcmask 523264
    %v272 = vsel %vm270, %v63, 0
    %274 = vmatprep.subr.bf16.mxu0 0
    %275 = vmatpush1.bf16.msra.mxu0 0
    %276 = vmatprep.subr.bf16.mxu0 0
    %277 = vmatpush1.bf16.msra.mxu0 0
    %278 = vmatprep.subr.bf16.mxu0 0
    %279 = vmatpush1.bf16.msra.mxu0 0
    %280 = vmatprep.subr.bf16.mxu0 0
    %281 = vmatpush1.bf16.msra.mxu0 0
    %282 = vmatprep.subr.bf16.mxu0 0
    %283 = vmatpush1.bf16.msra.mxu0 %v269
    %284 = vmatprep.subr.bf16.mxu0 0
    %285 = vmatpush1.bf16.msra.mxu0 %v268
    %286 = vmatprep.subr.bf16.mxu0 0
    %287 = vmatpush1.bf16.msra.mxu0 %v267
    %288 = vmatprep.subr.bf16.mxu0 0
    %289 = vmatpush1.bf16.msra.mxu0 %v266
    %290 = vmatprep.subr.bf16.mxu0 0
    %291 = vmatpush2.bf16.msra.mxu0 0
    %292 = vmatprep.subr.bf16.mxu0 0
    %293 = vmatpush2.bf16.msra.mxu0 0
    %294 = vmatprep.subr.bf16.mxu0 0
    %295 = vmatpush2.bf16.msra.mxu0 0
    %296 = vmatprep.subr.bf16.mxu0 0
    %297 = vmatpush2.bf16.msra.mxu0 0
    %298 = vmatprep.subr.bf16.mxu0 0
    %299 = vmatpush2.bf16.msra.mxu0 0
    %300 = vmatprep.subr.bf16.mxu0 0
    %301 = vmatpush2.bf16.msra.mxu0 0
    %302 = vmatprep.subr.bf16.mxu0 0
    %303 = vmatpush2.bf16.msra.mxu0 0
    %304 = vmatprep.subr.bf16.mxu0 0
    %305 = vmatpush2.bf16.msra.mxu0 0
    %306 = vmatprep.mubr.bf16.mxu0 0
    %307 = vmatmul.mubr.bf16.gmra.mxu0 %v272
    %v308 = vpop.f32.mrf.mxu0
    %v309 = vadd.f32 0.0, %v308
    %v310 = vpop.f32.mrf.mxu0
    %v311 = vpop.f32.mrf.mxu0
    %v312 = vpop.f32.mrf.mxu0
    %313 = vdwg.mxu0
    %v314 = vstv %s43
    %v315 = vadd.f32 %v309, %v314
    %v316 = vstv %s44
    %v317 = vadd.f32 %v309, %v316
    %v319 = vrot.slane %v45, 1
    %v321 = vmul.f32 %v45, %v319
    %v322 = vrot.slane %v45, 2
    %v324 = vmul.f32 %v321, %v322
    %v325 = vxor.u32 %v315, 2147483648
    %v326 = vmul.f32 %v325, 1.442695
    %v327 = vpow.pop %v326
    %v328 = vadd.f32 %v327, 1.0
    %v329 = vrcp.pop %v328
    %v330 = vmul.f32 1.0, %v329
    %v332 = vrot.slane %v330, 7
    %v334 = vmul.f32 %v324, %v332
    %v335 = vsub.f32 %v324, %v334
    %v337 = vrot.slane %v334, 1
    %vm339 = vcmask 1040384
    %v340 = vsel %vm339, %v337, %v335
    %vm341 = vcmask 1041408
    %v342 = vsel %vm341, %v340, 0.0
    %343 = vadd.xlane.f32.xlu0 %v342
    %v344 = vpop.xlane.xlu0 %343
    %v345 = vadd.f32 %v344, 1e-08
    %v346 = vrcp.pop %v345
    %v347 = vstv %s42
    %v348 = vsub.f32 %v344, %v347
    %v349 = vand.u32 2147483647, %v348
    %s350 = sand.u32 2147483647, %s42
    %s351 = smul.f32 %s350, 1e-05
    %s352 = sadd.f32 %s351, 0.0001
    %v353 = vstv %s352
    %vm354 = vcmp.le.f32.partialorder %v349, %v353
    %v355 = vsub.f32 %v347, %v344
    %v357 = vrot.slane %v355, 7
    %vm359 = vcmp.lt.f32.partialorder %v345, %v357
    %v361 = vrot.slane %v346, 1
    %v363 = vmul.f32 %v355, %v361
    %365 = vset.pattern.permute.xlu0 0
    %366 = vperm.xlu0 %365, %v363
    %v367 = vpop.permute.xlu0 %366
    %v370 = vrot.slane %v335, 1
    %v372 = vmul.f32 %v367, %v370
    %v374 = vrot.slane %v372, 7
    %v376 = vadd.f32 %v334, %v374
    %v377 = vsel %vm359, 1, 0
    %378 = vset.pattern.permute.xlu0 0
    %379 = vperm.xlu0 %378, %v377
    %v380 = vpop.permute.xlu0 %379
    %vm381 = vcmp.eq.s32.totalorder %v380, 1
    %v382 = vsel %vm381, %v324, %v376
    %v383 = vmul.f32 %v348, %v346
    %v384 = vsub.f32 1.0, %v383
    %v385 = vmul.f32 %v384, %v337
    %vm386 = vcmp.lt.f32.partialorder %v344, %v347
    %v387 = vsel %vm386, 1, 0
    %vm388 = vcmp.eq.s32.totalorder %v387, 1
    %v390 = vrot.slane %v382, 1
    %v392 = vsel %vm388, %v390, %v385
    %v393 = vsel %vm354, 1, 0
    %vm394 = vcmp.eq.s32.totalorder %v393, 1
    %v395 = vsel %vm394, %v337, %v392
    %v396 = vxor.u32 %v317, 2147483648
    %v397 = vmul.f32 %v396, 1.442695
    %v398 = vpow.pop %v397
    %v399 = vadd.f32 %v398, 1.0
    %v400 = vrcp.pop %v399
    %v401 = vmul.f32 1.0, %v400
    %vm402 = vcmp.lt.f32.partialorder %v317, 0.0
    %v403 = vsub.f32 1.0, %v401
    %v404 = vrot.slane %v45, 3
    %v406 = vmul.f32 %v403, %v404
    %v407 = vrot.slane %v45, 4
    %v409 = vmul.f32 %v401, %v407
    %v410 = vsel %vm402, %v406, %v409
    %v411 = vlaneseq
    %vm412 = vcmp.ge.s32.totalorder %v411, 0
    %vm413 = vcmp.lt.s32.totalorder %v411, 128
    %vm414 = vmand %vm412, %vm413
    %415 = vst.msk [vmem:[%s3] sm:$0x1] %vm414, %v395
    %v418 = vunpack.c.l.s4 1966171168
    %v419 = vunpack.c.0.s8 %v418
    %v420 = vlaneseq
    %v421 = vshrl.u32 %v420, 7
    %v422 = vsub.s32 %v419, %v421
    %v423 = vrot.slane %v410, %v422
    %v424 = vcombine.high %v423, %v423
    %v426 = vunpack.c.l.s4 1966171168
    %v427 = vunpack.c.0.s8 %v426
    %v428 = vlaneseq
    %v429 = vshrl.u32 %v428, 7
    %v430 = vsub.s32 %v427, %v429
    %v431 = vrot.slane %v424, %v430
    %433 = vst.msk [vmem:[%s3 + $0x1] sm:$0x1] %vm414, %v431
    // Predicated region
    $region22: #{forward.1} parent=1 // pred_check
      _
    $region23: #{forward.1} parent=1 // pred_check_branch
      %435 = sbr.rel (0) target = $region25
    $region24: #{forward.1} parent=1 // pred_region
      _
    $region25: #{forward.1} parent=1 // pred_fallthru
      _
    // Predicated region
    $region26: #{forward.1} parent=1 // pred_check
      _
    $region27: #{forward.1} parent=1 // pred_check_branch
      %437 = sbr.rel (0) target = $region29
    $region28: #{forward.1} parent=1 // pred_region
      _
    $region29: #{forward.1} parent=1 // pred_fallthru
      _
    %438 = vsyncpa [#allocation3], 1
    %439 = vsyncpa [#allocation4], 1

</llo_original>
